<compile_context>
chip_gen: v6e
topology: v6e:2x2x1
jax: 0.10.0
libtpu: 0.0.40
codegen_flags: <defaults>
</compile_context>

<pallas_src>
import math

import jax
import jax.numpy as jnp
from jax.experimental import pallas as pl
from jax.experimental.pallas import tpu as pltpu


def _round_up(x: int, m: int) -> int:
    return ((x + m - 1) // m) * m


def _cnn_head_kernel(x_ref, w_ref, b_ref, logits_ref, probs_ref):
    # x_ref: (tm, F), w_ref: (F, N) [pre-transposed], b_ref: (1, N)
    x = x_ref[...]
    w = w_ref[...]
    b = b_ref[...]

    # nn.Linear semantics: logits = x @ W^T + b, with W stored transposed as
    # (F, N) so the MXU consumes it directly (no cross-lane transpose here).
    logits = jnp.dot(x, w, preferred_element_type=jnp.float32) + b

    # Softmax along dim=1 (class axis), numerically stable, exact reciprocal
    # (f32 throughout so the result holds on v5e, which has no bf16 VPU/EUP).
    m = jnp.max(logits, axis=1, keepdims=True)
    e = jnp.exp(logits - m)
    denom = jnp.sum(e, axis=1, keepdims=True)
    probs = e * pl.reciprocal(denom, approx=False)

    logits_ref[...] = logits.astype(logits_ref.dtype)
    probs_ref[...] = probs.astype(probs_ref.dtype)


def prepare_cnn_head_params(weight, bias):
    """One-time parameter relayout (hoisted out of the forward wrapper).

    weight : (N, F) PyTorch nn.Linear layout  ->  w_t  : (F, N)
    bias   : (N,)                             ->  b2d  : (1, N)
    Cache the result; cnn_head_forward takes the prepared params.
    """
    return jnp.transpose(weight), bias.reshape(1, -1)


def _choose_batch_tile(B: int, F: int, N: int, *, max_tile: int = 2048,
                       vmem_budget_bytes: int = 32 << 20) -> int:
    """Pick the batch tile: as large as the VMEM budget allows, capped at
    max_tile, and capped at ceil(B/2) so v7x's two TensorCores both get work."""
    f_pad = _round_up(F, 128)
    n_pad = max(_round_up(N, 128), 128)
    # Per-row VMEM cost: double-buffered x tile + double-buffered logits+probs.
    bytes_per_row = 2 * f_pad * 4 + 2 * 2 * n_pad * 4
    # Resident cost: (double-buffered, lane-padded) weight + bias.
    resident = 2 * f_pad * n_pad * 4 + 2 * 8 * n_pad * 4
    avail = max(vmem_budget_bytes - resident, 0)
    tm = avail // bytes_per_row if bytes_per_row > 0 else max_tile
    tm = min(tm, max_tile)
    # v7x megacore: guarantee >= 2 grid steps (even split). No-op on v5e/v6e.
    half_b = _round_up(-(-B // 2), 8)
    tm = min(tm, half_b)
    # (8, 128) constraint: second-minor block dim must be a multiple of 8.
    tm = max(8, (int(tm) // 8) * 8)
    return int(tm)


def cnn_head_forward(x_nchw, w_t, b2d, *, max_batch_tile: int = 2048,
                     small_batch_threshold: int = 128):
    """CnnHead forward.

    x_nchw : (B, C, H, W) float32
    w_t    : (F, N) float32  (pre-transposed, from prepare_cnn_head_params)
    b2d    : (1, N) float32
    Returns (logits, probs), both (B, N) float32.
    """
    B = x_nchw.shape[0]
    F = math.prod(x_nchw.shape[1:])          # static Python int (no device op)
    N = w_t.shape[1]
    assert w_t.shape[0] == F, (w_t.shape, F)

    x_flat = x_nchw.reshape(B, F)            # == torch.flatten(input_batch, start_dim=1)

    out_shape = (
        jax.ShapeDtypeStruct((B, N), jnp.float32),
        jax.ShapeDtypeStruct((B, N), jnp.float32),
    )

    # Tiny batch: single whole-array block, no grid (launch-dominated anyway;
    # at B<=8 callers inside a larger jit may prefer plain jnp so XLA can fuse
    # with the upstream conv, but we keep the Pallas path here).
    small_fits_vmem = B * _round_up(F, 128) * 4 <= (8 << 20)
    if B <= small_batch_threshold and small_fits_vmem:
        logits, probs = pl.pallas_call(
            _cnn_head_kernel,
            out_shape=out_shape,
        )(x_flat, w_t, b2d)
        return logits, probs

    # Realistic batch: tile the batch dimension with a large, VMEM-budgeted
    # tile; keep the (F, N) weight and bias resident across batch tiles.
    tm = _choose_batch_tile(B, F, N, max_tile=max_batch_tile)
    grid = (pl.cdiv(B, tm),)
    logits, probs = pl.pallas_call(
        _cnn_head_kernel,
        out_shape=out_shape,
        grid_spec=pltpu.PrefetchScalarGridSpec(
            num_scalar_prefetch=0,
            grid=grid,
            in_specs=[
                pl.BlockSpec((tm, F), lambda i: (i, 0)),
                pl.BlockSpec((F, N), lambda i: (0, 0)),   # resident weight
                pl.BlockSpec((1, N), lambda i: (0, 0)),   # resident bias
            ],
            out_specs=[
                pl.BlockSpec((tm, N), lambda i: (i, 0)),
                pl.BlockSpec((tm, N), lambda i: (i, 0)),
            ],
        ),
        compiler_params=pltpu.CompilerParams(
            dimension_semantics=("parallel",),
            # Above v5e's 16 MiB scoped default (so large tiles compile),
            # comfortably below v7x's 64 MiB physical VMEM.
            vmem_limit_bytes=48 << 20,
        ),
    )(x_flat, w_t, b2d)
    return logits, probs


def init_cnn_head_params(key, in_features: int, out_features: int):
    # kaiming_normal_(mode='fan_in', nonlinearity='relu'):
    #   std = gain / sqrt(fan_in) with gain = sqrt(2)
    std = (2.0 / in_features) ** 0.5
    weight = std * jax.random.normal(key, (out_features, in_features), dtype=jnp.float32)
    bias = jnp.zeros((out_features,), dtype=jnp.float32)
    return weight, bias


if __name__ == "__main__":
    # Small shapes consistent with the module: NCHW conv features -> flatten -> linear.
    B, C, H, W = 2, 4, 16, 16
    in_features = C * H * W      # 1024
    out_features = 2             # nodule / non-nodule classification head

    key = jax.random.PRNGKey(0)
    kx, kw, kx2, kx3 = jax.random.split(key, 4)
    x_small = jax.random.normal(kx, (B, C, H, W), dtype=jnp.float32)
    weight, bias = init_cnn_head_params(kw, in_features, out_features)

    # Parameter relayout done ONCE (outside the per-call wrapper).
    w_t, b2d = prepare_cnn_head_params(weight, bias)

    def reference(x_in):
        xf = x_in.reshape(x_in.shape[0], -1)
        lg = jnp.matmul(xf, w_t, precision=jax.lax.Precision.HIGHEST) + bias
        return lg, jax.nn.softmax(lg, axis=1)

    def check(x_in):
        lg, pr = cnn_head_forward(x_in, w_t, b2d)
        jax.block_until_ready((lg, pr))
        rlg, rpr = reference(x_in)
        assert lg.shape == rlg.shape and pr.shape == rpr.shape
        assert bool(jnp.all(jnp.isfinite(lg))) and bool(jnp.all(jnp.isfinite(pr)))
        assert jnp.allclose(lg, rlg, atol=2e-3, rtol=2e-3), \
            float(jnp.max(jnp.abs(lg - rlg)))
        assert jnp.allclose(pr, rpr, atol=1e-3), \
            float(jnp.max(jnp.abs(pr - rpr)))
        assert jnp.allclose(jnp.sum(pr, axis=1), 1.0, atol=1e-4)

    # --- small-batch (no-grid) path ---
    check(x_small)

    # --- batch-tiled path with a tail tile (B % tm != 0) ---
    x_mid = jax.random.normal(kx2, (300, C, H, W), dtype=jnp.float32)
    check(x_mid)

    # --- batch-tiled path with a large tile (exercises the bigger tm) ---
    x_big = jax.random.normal(kx3, (2600, C, H, W), dtype=jnp.float32)
    check(x_big)

    print("KERNEL_OK")
</pallas_src>

<mosaic_0001>
module attributes {stable_mosaic.version = 11 : i64} {
  func.func @_cnn_head_kernel(%arg0: memref<2x1024xf32, #tpu.memory_space<vmem>>, %arg1: memref<1024x2xf32, #tpu.memory_space<vmem>>, %arg2: memref<1x2xf32, #tpu.memory_space<vmem>>, %arg3: memref<2x2xf32, #tpu.memory_space<vmem>>, %arg4: memref<2x2xf32, #tpu.memory_space<vmem>>) attributes {dimension_semantics = [], scalar_prefetch = 0 : i64, scratch_operands = 0 : i64, tpu.core_type = #tpu.core_type<tc>} {
    %c0 = arith.constant 0 : index
    %c0_0 = arith.constant 0 : index
    %0 = vector.load %arg0[%c0, %c0_0] : memref<2x1024xf32, #tpu.memory_space<vmem>>, vector<2x1024xf32>
    %c0_1 = arith.constant 0 : index
    %c0_2 = arith.constant 0 : index
    %1 = vector.load %arg1[%c0_1, %c0_2] : memref<1024x2xf32, #tpu.memory_space<vmem>>, vector<1024x2xf32>
    %c0_3 = arith.constant 0 : index
    %c0_4 = arith.constant 0 : index
    %2 = vector.load %arg2[%c0_3, %c0_4] : memref<1x2xf32, #tpu.memory_space<vmem>>, vector<1x2xf32>
    %cst = arith.constant dense<0.000000e+00> : vector<2x2xf32>
    %3 = tpu.matmul %0, %1, %cst {dimension_numbers = #tpu.dot_dimension_numbers<[1], [0], [0], [1], [0, 0, 1, 1], [], []>} : vector<2x1024xf32>, vector<1024x2xf32>, vector<2x2xf32> -> vector<2x2xf32>
    %4 = vector.broadcast %2 : vector<1x2xf32> to vector<2x2xf32>
    %5 = arith.addf %3, %4 : vector<2x2xf32>
    %cst_5 = arith.constant dense<0xFF800000> : vector<2xf32>
    %6 = vector.multi_reduction <maximumf>, %5, %cst_5 [1] : vector<2x2xf32> to vector<2xf32>
    %7 = vector.shape_cast %6 : vector<2xf32> to vector<2x1xf32>
    %8 = vector.broadcast %7 : vector<2x1xf32> to vector<2x2xf32>
    %9 = arith.subf %5, %8 : vector<2x2xf32>
    %10 = math.exp %9 : vector<2x2xf32>
    %cst_6 = arith.constant dense<0.000000e+00> : vector<2xf32>
    %11 = vector.multi_reduction <add>, %10, %cst_6 [1] : vector<2x2xf32> to vector<2xf32>
    %12 = vector.shape_cast %11 : vector<2xf32> to vector<2x1xf32>
    %13 = tpu.reciprocal %12 : vector<2x1xf32> -> vector<2x1xf32>
    %14 = vector.broadcast %13 : vector<2x1xf32> to vector<2x2xf32>
    %15 = arith.mulf %10, %14 : vector<2x2xf32>
    %c0_7 = arith.constant 0 : index
    %c0_8 = arith.constant 0 : index
    %16 = vector.load %arg3[%c0_7, %c0_8] : memref<2x2xf32, #tpu.memory_space<vmem>>, vector<2x2xf32>
    tpu.vector_store %arg3[%c0_7, %c0_8], %5 {strides = array<i32>} : memref<2x2xf32, #tpu.memory_space<vmem>>, vector<2x2xf32>,
    %c0_9 = arith.constant 0 : index
    %c0_10 = arith.constant 0 : index
    %17 = vector.load %arg4[%c0_9, %c0_10] : memref<2x2xf32, #tpu.memory_space<vmem>>, vector<2x2xf32>
    tpu.vector_store %arg4[%c0_9, %c0_10], %15 {strides = array<i32>} : memref<2x2xf32, #tpu.memory_space<vmem>>, vector<2x2xf32>,
    return
  }
}

</mosaic_0001>

<llo_original>
// kernel: tpu_custom_call.1
$region0: #{tpu_custom_call.1}
  #allocation0 [shape = 'u32[]', space=smem, size = 0x4, offset = 0x4, fixed_abs, tag = 'smem constant byte address 0x4 - core index']
  #allocation1 [shape = 'u32[144,128]{1,0:T(1,128)}', space=vmem, size = 0x12000, scoped, tag = 'internal scratch']
  %s0 = inlined_call_operand.vmem [shape: f32[2,1024], index: 0, kind: input, shape index: {}]
  %s1 = inlined_call_operand.vmem [shape: f32[1024,2], index: 1, kind: input, shape index: {}]
  %s2 = inlined_call_operand.vmem [shape: f32[1,2], index: 2, kind: input, shape index: {}]
  %s3 = inlined_call_operand.hbm [shape: f32[2,2], index: 3, kind: output, shape index: {0}]
  %s4 = inlined_call_operand.hbm [shape: f32[2,2], index: 4, kind: output, shape index: {1}]
  %5 = xla_tuple %s3, %s4
  %s6 = sld [smem:[#allocation0]]
  $region30: #{tpu_custom_call.1} parent=0
    _
  %s8 = ssub.s32 1, %s6
  %s9 = scalar_select 0, %s8, %s6
  $region1: #{tpu_custom_call.1} parent=0
    #allocation2 [shape = 'u8[1024]{0}', space=vmem, size = 0x400, scoped, tag = 'output window, operand 0, single buffered']
    #allocation3 [shape = 's32[1]{0}', space=sflag, size = 0x4, scoped, tag = 'scoped memory for tpu_custom_call.1']
    #allocation4 [shape = 'u8[1024]{0}', space=vmem, size = 0x400, scoped, tag = 'output window, operand 1, single buffered']
    #allocation5 [shape = 's32[1]{0}', space=sflag, size = 0x4, scoped, tag = 'scoped memory for tpu_custom_call.1']
    %10 = vsyncpa [#allocation3], 0
    %11 = vsyncpa [#allocation5], 0
    // Predicated region
    $region2: #{tpu_custom_call.1} parent=1 // pred_check
      _
    $region3: #{tpu_custom_call.1} parent=1 // pred_check_branch
      %13 = sbr.rel (0) target = $region5
    $region4: #{tpu_custom_call.1} parent=1 // pred_region
      _
    $region5: #{tpu_custom_call.1} parent=1 // pred_fallthru
      _
    // Predicated region
    $region6: #{tpu_custom_call.1} parent=1 // pred_check
      _
    $region7: #{tpu_custom_call.1} parent=1 // pred_check_branch
      %15 = sbr.rel (0) target = $region9
    $region8: #{tpu_custom_call.1} parent=1 // pred_region
      _
    $region9: #{tpu_custom_call.1} parent=1 // pred_fallthru
      _
    // Predicated region
    $region10: #{tpu_custom_call.1} parent=1 // pred_check
      _
    $region11: #{tpu_custom_call.1} parent=1 // pred_check_branch
      %17 = sbr.rel (0) target = $region13
    $region12: #{tpu_custom_call.1} parent=1 // pred_region
      _
    $region13: #{tpu_custom_call.1} parent=1 // pred_fallthru
      _
    %v18 = vld [vmem:[%s0] sm:$0xff]
    %v19 = vld [vmem:[%s0 + $0x8] sm:$0xff]
    %v20 = vld [vmem:[%s1] sm:$0xff]
    %v21 = vld [vmem:[%s1 + $0x8] sm:$0xff]
    %v22 = vld [vmem:[%s1 + $0x10] sm:$0xff]
    %v23 = vld [vmem:[%s1 + $0x18] sm:$0xff]
    %v24 = vld [vmem:[%s1 + $0x20] sm:$0xff]
    %v25 = vld [vmem:[%s1 + $0x28] sm:$0xff]
    %v26 = vld [vmem:[%s1 + $0x30] sm:$0xff]
    %v27 = vld [vmem:[%s1 + $0x38] sm:$0xff]
    %v28 = vld [vmem:[%s1 + $0x40] sm:$0xff]
    %v29 = vld [vmem:[%s1 + $0x48] sm:$0xff]
    %v30 = vld [vmem:[%s1 + $0x50] sm:$0xff]
    %v31 = vld [vmem:[%s1 + $0x58] sm:$0xff]
    %v32 = vld [vmem:[%s1 + $0x60] sm:$0xff]
    %v33 = vld [vmem:[%s1 + $0x68] sm:$0xff]
    %v34 = vld [vmem:[%s1 + $0x70] sm:$0xff]
    %v35 = vld [vmem:[%s1 + $0x78] sm:$0xff]
    %v36 = vld [vmem:[%s1 + $0x80] sm:$0xff]
    %v37 = vld [vmem:[%s1 + $0x88] sm:$0xff]
    %v38 = vld [vmem:[%s1 + $0x90] sm:$0xff]
    %v39 = vld [vmem:[%s1 + $0x98] sm:$0xff]
    %v40 = vld [vmem:[%s1 + $0xa0] sm:$0xff]
    %v41 = vld [vmem:[%s1 + $0xa8] sm:$0xff]
    %v42 = vld [vmem:[%s1 + $0xb0] sm:$0xff]
    %v43 = vld [vmem:[%s1 + $0xb8] sm:$0xff]
    %v44 = vld [vmem:[%s1 + $0xc0] sm:$0xff]
    %v45 = vld [vmem:[%s1 + $0xc8] sm:$0xff]
    %v46 = vld [vmem:[%s1 + $0xd0] sm:$0xff]
    %v47 = vld [vmem:[%s1 + $0xd8] sm:$0xff]
    %v48 = vld [vmem:[%s1 + $0xe0] sm:$0xff]
    %v49 = vld [vmem:[%s1 + $0xe8] sm:$0xff]
    %v50 = vld [vmem:[%s1 + $0xf0] sm:$0xff]
    %v51 = vld [vmem:[%s1 + $0xf8] sm:$0xff]
    %v52 = vld [vmem:[%s1 + $0x100] sm:$0xff]
    %v53 = vld [vmem:[%s1 + $0x108] sm:$0xff]
    %v54 = vld [vmem:[%s1 + $0x110] sm:$0xff]
    %v55 = vld [vmem:[%s1 + $0x118] sm:$0xff]
    %v56 = vld [vmem:[%s1 + $0x120] sm:$0xff]
    %v57 = vld [vmem:[%s1 + $0x128] sm:$0xff]
    %v58 = vld [vmem:[%s1 + $0x130] sm:$0xff]
    %v59 = vld [vmem:[%s1 + $0x138] sm:$0xff]
    %v60 = vld [vmem:[%s1 + $0x140] sm:$0xff]
    %v61 = vld [vmem:[%s1 + $0x148] sm:$0xff]
    %v62 = vld [vmem:[%s1 + $0x150] sm:$0xff]
    %v63 = vld [vmem:[%s1 + $0x158] sm:$0xff]
    %v64 = vld [vmem:[%s1 + $0x160] sm:$0xff]
    %v65 = vld [vmem:[%s1 + $0x168] sm:$0xff]
    %v66 = vld [vmem:[%s1 + $0x170] sm:$0xff]
    %v67 = vld [vmem:[%s1 + $0x178] sm:$0xff]
    %v68 = vld [vmem:[%s1 + $0x180] sm:$0xff]
    %v69 = vld [vmem:[%s1 + $0x188] sm:$0xff]
    %v70 = vld [vmem:[%s1 + $0x190] sm:$0xff]
    %v71 = vld [vmem:[%s1 + $0x198] sm:$0xff]
    %v72 = vld [vmem:[%s1 + $0x1a0] sm:$0xff]
    %v73 = vld [vmem:[%s1 + $0x1a8] sm:$0xff]
    %v74 = vld [vmem:[%s1 + $0x1b0] sm:$0xff]
    %v75 = vld [vmem:[%s1 + $0x1b8] sm:$0xff]
    %v76 = vld [vmem:[%s1 + $0x1c0] sm:$0xff]
    %v77 = vld [vmem:[%s1 + $0x1c8] sm:$0xff]
    %v78 = vld [vmem:[%s1 + $0x1d0] sm:$0xff]
    %v79 = vld [vmem:[%s1 + $0x1d8] sm:$0xff]
    %v80 = vld [vmem:[%s1 + $0x1e0] sm:$0xff]
    %v81 = vld [vmem:[%s1 + $0x1e8] sm:$0xff]
    %v82 = vld [vmem:[%s1 + $0x1f0] sm:$0xff]
    %v83 = vld [vmem:[%s1 + $0x1f8] sm:$0xff]
    %v84 = vld [vmem:[%s1 + $0x200] sm:$0xff]
    %v85 = vld [vmem:[%s1 + $0x208] sm:$0xff]
    %v86 = vld [vmem:[%s1 + $0x210] sm:$0xff]
    %v87 = vld [vmem:[%s1 + $0x218] sm:$0xff]
    %v88 = vld [vmem:[%s1 + $0x220] sm:$0xff]
    %v89 = vld [vmem:[%s1 + $0x228] sm:$0xff]
    %v90 = vld [vmem:[%s1 + $0x230] sm:$0xff]
    %v91 = vld [vmem:[%s1 + $0x238] sm:$0xff]
    %v92 = vld [vmem:[%s1 + $0x240] sm:$0xff]
    %v93 = vld [vmem:[%s1 + $0x248] sm:$0xff]
    %v94 = vld [vmem:[%s1 + $0x250] sm:$0xff]
    %v95 = vld [vmem:[%s1 + $0x258] sm:$0xff]
    %v96 = vld [vmem:[%s1 + $0x260] sm:$0xff]
    %v97 = vld [vmem:[%s1 + $0x268] sm:$0xff]
    %v98 = vld [vmem:[%s1 + $0x270] sm:$0xff]
    %v99 = vld [vmem:[%s1 + $0x278] sm:$0xff]
    %v100 = vld [vmem:[%s1 + $0x280] sm:$0xff]
    %v101 = vld [vmem:[%s1 + $0x288] sm:$0xff]
    %v102 = vld [vmem:[%s1 + $0x290] sm:$0xff]
    %v103 = vld [vmem:[%s1 + $0x298] sm:$0xff]
    %v104 = vld [vmem:[%s1 + $0x2a0] sm:$0xff]
    %v105 = vld [vmem:[%s1 + $0x2a8] sm:$0xff]
    %v106 = vld [vmem:[%s1 + $0x2b0] sm:$0xff]
    %v107 = vld [vmem:[%s1 + $0x2b8] sm:$0xff]
    %v108 = vld [vmem:[%s1 + $0x2c0] sm:$0xff]
    %v109 = vld [vmem:[%s1 + $0x2c8] sm:$0xff]
    %v110 = vld [vmem:[%s1 + $0x2d0] sm:$0xff]
    %v111 = vld [vmem:[%s1 + $0x2d8] sm:$0xff]
    %v112 = vld [vmem:[%s1 + $0x2e0] sm:$0xff]
    %v113 = vld [vmem:[%s1 + $0x2e8] sm:$0xff]
    %v114 = vld [vmem:[%s1 + $0x2f0] sm:$0xff]
    %v115 = vld [vmem:[%s1 + $0x2f8] sm:$0xff]
    %v116 = vld [vmem:[%s1 + $0x300] sm:$0xff]
    %v117 = vld [vmem:[%s1 + $0x308] sm:$0xff]
    %v118 = vld [vmem:[%s1 + $0x310] sm:$0xff]
    %v119 = vld [vmem:[%s1 + $0x318] sm:$0xff]
    %v120 = vld [vmem:[%s1 + $0x320] sm:$0xff]
    %v121 = vld [vmem:[%s1 + $0x328] sm:$0xff]
    %v122 = vld [vmem:[%s1 + $0x330] sm:$0xff]
    %v123 = vld [vmem:[%s1 + $0x338] sm:$0xff]
    %v124 = vld [vmem:[%s1 + $0x340] sm:$0xff]
    %v125 = vld [vmem:[%s1 + $0x348] sm:$0xff]
    %v126 = vld [vmem:[%s1 + $0x350] sm:$0xff]
    %v127 = vld [vmem:[%s1 + $0x358] sm:$0xff]
    %v128 = vld [vmem:[%s1 + $0x360] sm:$0xff]
    %v129 = vld [vmem:[%s1 + $0x368] sm:$0xff]
    %v130 = vld [vmem:[%s1 + $0x370] sm:$0xff]
    %v131 = vld [vmem:[%s1 + $0x378] sm:$0xff]
    %v132 = vld [vmem:[%s1 + $0x380] sm:$0xff]
    %v133 = vld [vmem:[%s1 + $0x388] sm:$0xff]
    %v134 = vld [vmem:[%s1 + $0x390] sm:$0xff]
    %v135 = vld [vmem:[%s1 + $0x398] sm:$0xff]
    %v136 = vld [vmem:[%s1 + $0x3a0] sm:$0xff]
    %v137 = vld [vmem:[%s1 + $0x3a8] sm:$0xff]
    %v138 = vld [vmem:[%s1 + $0x3b0] sm:$0xff]
    %v139 = vld [vmem:[%s1 + $0x3b8] sm:$0xff]
    %v140 = vld [vmem:[%s1 + $0x3c0] sm:$0xff]
    %v141 = vld [vmem:[%s1 + $0x3c8] sm:$0xff]
    %v142 = vld [vmem:[%s1 + $0x3d0] sm:$0xff]
    %v143 = vld [vmem:[%s1 + $0x3d8] sm:$0xff]
    %v144 = vld [vmem:[%s1 + $0x3e0] sm:$0xff]
    %v145 = vld [vmem:[%s1 + $0x3e8] sm:$0xff]
    %v146 = vld [vmem:[%s1 + $0x3f0] sm:$0xff]
    %v147 = vld [vmem:[%s1 + $0x3f8] sm:$0xff]
    %v148 = vld [vmem:[%s2] sm:$0x1]
    %v150 = vlaneseq
    %v151 = vshrl.u32 %v150, 7
    %v152 = vsub.s32 0, %v151
    %v153 = vrot.slane %v148, %v152
    %v157 = vcombine.high %v18, %v18
    %v159 = vunpack.c.l.s4 1983009808
    %v160 = vunpack.c.0.s8 %v159
    %v161 = vlaneseq
    %v162 = vshrl.u32 %v161, 7
    %v163 = vsub.s32 %v160, %v162
    %v164 = vrot.slane %v18, %v163
    %v166 = vunpack.c.l.s4 1983009808
    %v167 = vunpack.c.0.s8 %v166
    %v168 = vlaneseq
    %v169 = vshrl.u32 %v168, 7
    %v170 = vsub.s32 %v167, %v169
    %v171 = vrot.slane %v157, %v170
    %v172 = vcombine.high %v164, %v164
    %v173 = vcombine.high %v171, %v171
    %v174 = vcombine.high %v19, %v19
    %v176 = vunpack.c.l.s4 1983009808
    %v177 = vunpack.c.0.s8 %v176
    %v178 = vlaneseq
    %v179 = vshrl.u32 %v178, 7
    %v180 = vsub.s32 %v177, %v179
    %v181 = vrot.slane %v19, %v180
    %v183 = vunpack.c.l.s4 1983009808
    %v184 = vunpack.c.0.s8 %v183
    %v185 = vlaneseq
    %v186 = vshrl.u32 %v185, 7
    %v187 = vsub.s32 %v184, %v186
    %v188 = vrot.slane %v174, %v187
    %v189 = vcombine.high %v181, %v181
    %v190 = vcombine.high %v188, %v188
    %199 = vmatprep.subr.mxu0 0.0
    %200 = vmatpush1.msra.mxu0 %v35
    %201 = vmatprep.subr.mxu0 0.0
    %202 = vmatpush1.msra.mxu0 %v34
    %203 = vmatprep.subr.mxu0 0.0
    %204 = vmatpush1.msra.mxu0 %v33
    %205 = vmatprep.subr.mxu0 0.0
    %206 = vmatpush1.msra.mxu0 %v32
    %207 = vmatprep.subr.mxu0 0.0
    %208 = vmatpush1.msra.mxu0 %v31
    %209 = vmatprep.subr.mxu0 0.0
    %210 = vmatpush1.msra.mxu0 %v30
    %211 = vmatprep.subr.mxu0 0.0
    %212 = vmatpush1.msra.mxu0 %v29
    %213 = vmatprep.subr.mxu0 0.0
    %214 = vmatpush1.msra.mxu0 %v28
    %215 = vmatprep.subr.mxu0 0.0
    %216 = vmatpush1.msra.mxu0 %v27
    %217 = vmatprep.subr.mxu0 0.0
    %218 = vmatpush1.msra.mxu0 %v26
    %219 = vmatprep.subr.mxu0 0.0
    %220 = vmatpush1.msra.mxu0 %v25
    %221 = vmatprep.subr.mxu0 0.0
    %222 = vmatpush1.msra.mxu0 %v24
    %223 = vmatprep.subr.mxu0 0.0
    %224 = vmatpush1.msra.mxu0 %v23
    %225 = vmatprep.subr.mxu0 0.0
    %226 = vmatpush1.msra.mxu0 %v22
    %227 = vmatprep.subr.mxu0 0.0
    %228 = vmatpush1.msra.mxu0 %v21
    %229 = vmatprep.subr.mxu0 0.0
    %230 = vmatpush1.msra.mxu0 %v20
    %231 = vmatprep.subr.mxu0 0.0
    %232 = vmatpush2.msra.mxu0 %v51
    %233 = vmatprep.subr.mxu0 0.0
    %234 = vmatpush2.msra.mxu0 %v50
    %235 = vmatprep.subr.mxu0 0.0
    %236 = vmatpush2.msra.mxu0 %v49
    %237 = vmatprep.subr.mxu0 0.0
    %238 = vmatpush2.msra.mxu0 %v48
    %239 = vmatprep.subr.mxu0 0.0
    %240 = vmatpush2.msra.mxu0 %v47
    %241 = vmatprep.subr.mxu0 0.0
    %242 = vmatpush2.msra.mxu0 %v46
    %243 = vmatprep.subr.mxu0 0.0
    %244 = vmatpush2.msra.mxu0 %v45
    %245 = vmatprep.subr.mxu0 0.0
    %246 = vmatpush2.msra.mxu0 %v44
    %247 = vmatprep.subr.mxu0 0.0
    %248 = vmatpush2.msra.mxu0 %v43
    %249 = vmatprep.subr.mxu0 0.0
    %250 = vmatpush2.msra.mxu0 %v42
    %251 = vmatprep.subr.mxu0 0.0
    %252 = vmatpush2.msra.mxu0 %v41
    %253 = vmatprep.subr.mxu0 0.0
    %254 = vmatpush2.msra.mxu0 %v40
    %255 = vmatprep.subr.mxu0 0.0
    %256 = vmatpush2.msra.mxu0 %v39
    %257 = vmatprep.subr.mxu0 0.0
    %258 = vmatpush2.msra.mxu0 %v38
    %259 = vmatprep.subr.mxu0 0.0
    %260 = vmatpush2.msra.mxu0 %v37
    %261 = vmatprep.subr.mxu0 0.0
    %262 = vmatpush2.msra.mxu0 %v36
    %263 = vmatprep.mubr.f32.mxu0 %v172
    %264 = vmatmul.mubr.f32.gmra.mxu0 %v164
    %v265 = vpop.f32.mrf.mxu0
    %v266 = vadd.f32 %v153, %v265
    %v267 = vpop.f32.mrf.mxu0
    %268 = vdwg.mxu0
    %269 = vmatprep.subr.mxu0 0.0
    %270 = vmatpush1.msra.mxu0 %v67
    %271 = vmatprep.subr.mxu0 0.0
    %272 = vmatpush1.msra.mxu0 %v66
    %273 = vmatprep.subr.mxu0 0.0
    %274 = vmatpush1.msra.mxu0 %v65
    %275 = vmatprep.subr.mxu0 0.0
    %276 = vmatpush1.msra.mxu0 %v64
    %277 = vmatprep.subr.mxu0 0.0
    %278 = vmatpush1.msra.mxu0 %v63
    %279 = vmatprep.subr.mxu0 0.0
    %280 = vmatpush1.msra.mxu0 %v62
    %281 = vmatprep.subr.mxu0 0.0
    %282 = vmatpush1.msra.mxu0 %v61
    %283 = vmatprep.subr.mxu0 0.0
    %284 = vmatpush1.msra.mxu0 %v60
    %285 = vmatprep.subr.mxu0 0.0
    %286 = vmatpush1.msra.mxu0 %v59
    %287 = vmatprep.subr.mxu0 0.0
    %288 = vmatpush1.msra.mxu0 %v58
    %289 = vmatprep.subr.mxu0 0.0
    %290 = vmatpush1.msra.mxu0 %v57
    %291 = vmatprep.subr.mxu0 0.0
    %292 = vmatpush1.msra.mxu0 %v56
    %293 = vmatprep.subr.mxu0 0.0
    %294 = vmatpush1.msra.mxu0 %v55
    %295 = vmatprep.subr.mxu0 0.0
    %296 = vmatpush1.msra.mxu0 %v54
    %297 = vmatprep.subr.mxu0 0.0
    %298 = vmatpush1.msra.mxu0 %v53
    %299 = vmatprep.subr.mxu0 0.0
    %300 = vmatpush1.msra.mxu0 %v52
    %301 = vmatprep.subr.mxu0 0.0
    %302 = vmatpush2.msra.mxu0 %v83
    %303 = vmatprep.subr.mxu0 0.0
    %304 = vmatpush2.msra.mxu0 %v82
    %305 = vmatprep.subr.mxu0 0.0
    %306 = vmatpush2.msra.mxu0 %v81
    %307 = vmatprep.subr.mxu0 0.0
    %308 = vmatpush2.msra.mxu0 %v80
    %309 = vmatprep.subr.mxu0 0.0
    %310 = vmatpush2.msra.mxu0 %v79
    %311 = vmatprep.subr.mxu0 0.0
    %312 = vmatpush2.msra.mxu0 %v78
    %313 = vmatprep.subr.mxu0 0.0
    %314 = vmatpush2.msra.mxu0 %v77
    %315 = vmatprep.subr.mxu0 0.0
    %316 = vmatpush2.msra.mxu0 %v76
    %317 = vmatprep.subr.mxu0 0.0
    %318 = vmatpush2.msra.mxu0 %v75
    %319 = vmatprep.subr.mxu0 0.0
    %320 = vmatpush2.msra.mxu0 %v74
    %321 = vmatprep.subr.mxu0 0.0
    %322 = vmatpush2.msra.mxu0 %v73
    %323 = vmatprep.subr.mxu0 0.0
    %324 = vmatpush2.msra.mxu0 %v72
    %325 = vmatprep.subr.mxu0 0.0
    %326 = vmatpush2.msra.mxu0 %v71
    %327 = vmatprep.subr.mxu0 0.0
    %328 = vmatpush2.msra.mxu0 %v70
    %329 = vmatprep.subr.mxu0 0.0
    %330 = vmatpush2.msra.mxu0 %v69
    %331 = vmatprep.subr.mxu0 0.0
    %332 = vmatpush2.msra.mxu0 %v68
    %333 = vmatprep.mubr.f32.mxu0 %v173
    %334 = vmatmul.mubr.f32.gmra.mxu0 %v171
    %v335 = vpop.f32.mrf.mxu0
    %v336 = vadd.f32 %v266, %v335
    %v337 = vpop.f32.mrf.mxu0
    %338 = vdwg.mxu0
    %339 = vmatprep.subr.mxu0 0.0
    %340 = vmatpush1.msra.mxu0 %v99
    %341 = vmatprep.subr.mxu0 0.0
    %342 = vmatpush1.msra.mxu0 %v98
    %343 = vmatprep.subr.mxu0 0.0
    %344 = vmatpush1.msra.mxu0 %v97
    %345 = vmatprep.subr.mxu0 0.0
    %346 = vmatpush1.msra.mxu0 %v96
    %347 = vmatprep.subr.mxu0 0.0
    %348 = vmatpush1.msra.mxu0 %v95
    %349 = vmatprep.subr.mxu0 0.0
    %350 = vmatpush1.msra.mxu0 %v94
    %351 = vmatprep.subr.mxu0 0.0
    %352 = vmatpush1.msra.mxu0 %v93
    %353 = vmatprep.subr.mxu0 0.0
    %354 = vmatpush1.msra.mxu0 %v92
    %355 = vmatprep.subr.mxu0 0.0
    %356 = vmatpush1.msra.mxu0 %v91
    %357 = vmatprep.subr.mxu0 0.0
    %358 = vmatpush1.msra.mxu0 %v90
    %359 = vmatprep.subr.mxu0 0.0
    %360 = vmatpush1.msra.mxu0 %v89
    %361 = vmatprep.subr.mxu0 0.0
    %362 = vmatpush1.msra.mxu0 %v88
    %363 = vmatprep.subr.mxu0 0.0
    %364 = vmatpush1.msra.mxu0 %v87
    %365 = vmatprep.subr.mxu0 0.0
    %366 = vmatpush1.msra.mxu0 %v86
    %367 = vmatprep.subr.mxu0 0.0
    %368 = vmatpush1.msra.mxu0 %v85
    %369 = vmatprep.subr.mxu0 0.0
    %370 = vmatpush1.msra.mxu0 %v84
    %371 = vmatprep.subr.mxu0 0.0
    %372 = vmatpush2.msra.mxu0 %v115
    %373 = vmatprep.subr.mxu0 0.0
    %374 = vmatpush2.msra.mxu0 %v114
    %375 = vmatprep.subr.mxu0 0.0
    %376 = vmatpush2.msra.mxu0 %v113
    %377 = vmatprep.subr.mxu0 0.0
    %378 = vmatpush2.msra.mxu0 %v112
    %379 = vmatprep.subr.mxu0 0.0
    %380 = vmatpush2.msra.mxu0 %v111
    %381 = vmatprep.subr.mxu0 0.0
    %382 = vmatpush2.msra.mxu0 %v110
    %383 = vmatprep.subr.mxu0 0.0
    %384 = vmatpush2.msra.mxu0 %v109
    %385 = vmatprep.subr.mxu0 0.0
    %386 = vmatpush2.msra.mxu0 %v108
    %387 = vmatprep.subr.mxu0 0.0
    %388 = vmatpush2.msra.mxu0 %v107
    %389 = vmatprep.subr.mxu0 0.0
    %390 = vmatpush2.msra.mxu0 %v106
    %391 = vmatprep.subr.mxu0 0.0
    %392 = vmatpush2.msra.mxu0 %v105
    %393 = vmatprep.subr.mxu0 0.0
    %394 = vmatpush2.msra.mxu0 %v104
    %395 = vmatprep.subr.mxu0 0.0
    %396 = vmatpush2.msra.mxu0 %v103
    %397 = vmatprep.subr.mxu0 0.0
    %398 = vmatpush2.msra.mxu0 %v102
    %399 = vmatprep.subr.mxu0 0.0
    %400 = vmatpush2.msra.mxu0 %v101
    %401 = vmatprep.subr.mxu0 0.0
    %402 = vmatpush2.msra.mxu0 %v100
    %403 = vmatprep.mubr.f32.mxu0 %v189
    %404 = vmatmul.mubr.f32.gmra.mxu0 %v181
    %v405 = vpop.f32.mrf.mxu0
    %v406 = vadd.f32 %v336, %v405
    %v407 = vpop.f32.mrf.mxu0
    %408 = vdwg.mxu0
    %409 = vmatprep.subr.mxu0 0.0
    %410 = vmatpush1.msra.mxu0 %v131
    %411 = vmatprep.subr.mxu0 0.0
    %412 = vmatpush1.msra.mxu0 %v130
    %413 = vmatprep.subr.mxu0 0.0
    %414 = vmatpush1.msra.mxu0 %v129
    %415 = vmatprep.subr.mxu0 0.0
    %416 = vmatpush1.msra.mxu0 %v128
    %417 = vmatprep.subr.mxu0 0.0
    %418 = vmatpush1.msra.mxu0 %v127
    %419 = vmatprep.subr.mxu0 0.0
    %420 = vmatpush1.msra.mxu0 %v126
    %421 = vmatprep.subr.mxu0 0.0
    %422 = vmatpush1.msra.mxu0 %v125
    %423 = vmatprep.subr.mxu0 0.0
    %424 = vmatpush1.msra.mxu0 %v124
    %425 = vmatprep.subr.mxu0 0.0
    %426 = vmatpush1.msra.mxu0 %v123
    %427 = vmatprep.subr.mxu0 0.0
    %428 = vmatpush1.msra.mxu0 %v122
    %429 = vmatprep.subr.mxu0 0.0
    %430 = vmatpush1.msra.mxu0 %v121
    %431 = vmatprep.subr.mxu0 0.0
    %432 = vmatpush1.msra.mxu0 %v120
    %433 = vmatprep.subr.mxu0 0.0
    %434 = vmatpush1.msra.mxu0 %v119
    %435 = vmatprep.subr.mxu0 0.0
    %436 = vmatpush1.msra.mxu0 %v118
    %437 = vmatprep.subr.mxu0 0.0
    %438 = vmatpush1.msra.mxu0 %v117
    %439 = vmatprep.subr.mxu0 0.0
    %440 = vmatpush1.msra.mxu0 %v116
    %441 = vmatprep.subr.mxu0 0.0
    %442 = vmatpush2.msra.mxu0 %v147
    %443 = vmatprep.subr.mxu0 0.0
    %444 = vmatpush2.msra.mxu0 %v146
    %445 = vmatprep.subr.mxu0 0.0
    %446 = vmatpush2.msra.mxu0 %v145
    %447 = vmatprep.subr.mxu0 0.0
    %448 = vmatpush2.msra.mxu0 %v144
    %449 = vmatprep.subr.mxu0 0.0
    %450 = vmatpush2.msra.mxu0 %v143
    %451 = vmatprep.subr.mxu0 0.0
    %452 = vmatpush2.msra.mxu0 %v142
    %453 = vmatprep.subr.mxu0 0.0
    %454 = vmatpush2.msra.mxu0 %v141
    %455 = vmatprep.subr.mxu0 0.0
    %456 = vmatpush2.msra.mxu0 %v140
    %457 = vmatprep.subr.mxu0 0.0
    %458 = vmatpush2.msra.mxu0 %v139
    %459 = vmatprep.subr.mxu0 0.0
    %460 = vmatpush2.msra.mxu0 %v138
    %461 = vmatprep.subr.mxu0 0.0
    %462 = vmatpush2.msra.mxu0 %v137
    %463 = vmatprep.subr.mxu0 0.0
    %464 = vmatpush2.msra.mxu0 %v136
    %465 = vmatprep.subr.mxu0 0.0
    %466 = vmatpush2.msra.mxu0 %v135
    %467 = vmatprep.subr.mxu0 0.0
    %468 = vmatpush2.msra.mxu0 %v134
    %469 = vmatprep.subr.mxu0 0.0
    %470 = vmatpush2.msra.mxu0 %v133
    %471 = vmatprep.subr.mxu0 0.0
    %472 = vmatpush2.msra.mxu0 %v132
    %473 = vmatprep.mubr.f32.mxu0 %v190
    %474 = vmatmul.mubr.f32.gmra.mxu0 %v188
    %v475 = vpop.f32.mrf.mxu0
    %v476 = vadd.f32 %v406, %v475
    %v477 = vpop.f32.mrf.mxu0
    %478 = vdwg.mxu0
    %vm479 = vcmask 9216
    %v480 = vsel %vm479, %v476, -inf
    %481 = vmax.xlane.f32.xlu0 %v480
    %v482 = vpop.xlane.xlu0 %481
    %v483 = vsub.f32 %v476, %v482
    %v484 = vmul.f32 %v483, 1.442695
    %v485 = vpow.pop %v484
    %v486 = vsel %vm479, %v485, 0.0
    %487 = vadd.xlane.f32.xlu0 %v486
    %v488 = vpop.xlane.xlu0 %487
    %v489 = vrcp.pop %v488
    %v490 = vmul.f32 %v485, %v489
    %491 = vst.msk [vmem:[#allocation2] sm:$0x3] %vm479, %v476
    %492 = vst.msk [vmem:[#allocation4] sm:$0x3] %vm479, %v490
    // Predicated region
    $region14: #{tpu_custom_call.1} parent=1 // pred_check
      _
    $region15: #{tpu_custom_call.1} parent=1 // pred_check_branch
      %494 = sbr.rel (0) target = $region17
    $region16: #{tpu_custom_call.1} parent=1 // pred_region
      %s496 = ssub.s32 32, 32
      %497 = vsyncadd [#allocation3], %s496
      %s499 = sshll.u32 [#allocation2], 4
      %s500 = int_to_ptr.vmem [resolvable:$true] %s499
      %502 = dma.vmem_to_hbm [thread:$0]  %s500, 32, %s3, [#allocation3]
    $region17: #{tpu_custom_call.1} parent=1 // pred_fallthru
      _
    // Predicated region
    $region18: #{tpu_custom_call.1} parent=1 // pred_check
      _
    $region19: #{tpu_custom_call.1} parent=1 // pred_check_branch
      %504 = sbr.rel (0) target = $region21
    $region20: #{tpu_custom_call.1} parent=1 // pred_region
      %s506 = ssub.s32 32, 32
      %507 = vsyncadd [#allocation5], %s506
      %s509 = sshll.u32 [#allocation4], 4
      %s510 = int_to_ptr.vmem [resolvable:$true] %s509
      %512 = dma.vmem_to_hbm [thread:$0]  %s510, 32, %s4, [#allocation5]
    $region21: #{tpu_custom_call.1} parent=1 // pred_fallthru
      _
    // Predicated region
    $region22: #{tpu_custom_call.1} parent=1 // pred_check
      _
    $region23: #{tpu_custom_call.1} parent=1 // pred_check_branch
      %514 = sbr.rel (0) target = $region25
    $region24: #{tpu_custom_call.1} parent=1 // pred_region
      %515 = dma.done [#allocation3], 32
    $region25: #{tpu_custom_call.1} parent=1 // pred_fallthru
      _
    // Predicated region
    $region26: #{tpu_custom_call.1} parent=1 // pred_check
      _
    $region27: #{tpu_custom_call.1} parent=1 // pred_check_branch
      %517 = sbr.rel (0) target = $region29
    $region28: #{tpu_custom_call.1} parent=1 // pred_region
      %518 = dma.done [#allocation5], 32
    $region29: #{tpu_custom_call.1} parent=1 // pred_fallthru
      _
    %519 = vsyncpa [#allocation3], 1
    %520 = vsyncpa [#allocation5], 1

</llo_original>
